<compile_context>
chip_gen: v6e
topology: v6e:2x2x1
jax: 0.10.0
libtpu: 0.0.40
codegen_flags: <defaults>
</compile_context>

<pallas_src>
import functools

import jax
import jax.numpy as jnp
from jax.experimental import pallas as pl
from jax.experimental.pallas import tpu as pltpu


def _conv3x3_kernel(xp_ref, xc_ref, xn_ref, w_ref, o_ref, *, width, add_ones):
    """One (batch, row-tile) block of a 3x3 stride-1 'same' convolution.

    xp_ref/xn_ref: (1, in_c, HALO) neighbour chunks ending at / starting at the tile
                   boundary (only their last / first image row is used).
    xc_ref:        (1, in_c, BLK)  current row tile of the flattened (in_c, H*W) image.
    w_ref:         (out_c, K)      K = 9*in_c (+1 if bias folded in), tap-major ordering.
    o_ref:         (1, out_c, BLK)
    """
    W = width
    in_c, blk = xc_ref.shape[1], xc_ref.shape[2]
    halo = xp_ref.shape[2]
    dt = xc_ref.dtype

    r = pl.program_id(1)
    nr = pl.num_programs(1)

    xc = xc_ref[0]                                             # (in_c, BLK)
    above = xp_ref[0, :, halo - W:]                            # last row of previous tile
    below = xn_ref[0, :, :W]                                   # first row of next tile
    zero_row = jnp.zeros_like(above)
    above = jnp.where(r > 0, above, zero_row)                  # zero padding at image top
    below = jnp.where(r < nr - 1, below, zero_row)             # zero padding at image bottom

    # ext[:, j] = flattened pixel (r*BLK + j - (W+1)); the sentinel zero columns keep the two
    # extreme corner-tap slices in range (their values are masked anyway).
    zcol = jnp.zeros((in_c, 1), dt)
    ext = jnp.concatenate([zcol, above, xc, below, zcol], axis=-1)   # (in_c, BLK + 2W + 2)

    # Column-validity masks for dx = -1 / +1 taps, built in-kernel (no HBM side input).
    col = jax.lax.broadcasted_iota(jnp.int32, (1, blk), 1) % W
    not_first = col != 0
    not_last = col != (W - 1)

    # im2col operand: 9 shifted (in_c, BLK) slices stacked along K (tap-major order),
    # plus an optional constant-1 row that carries the bias through the matmul.
    pieces = []
    for dy in (-1, 0, 1):
        for dx in (-1, 0, 1):
            start = (W + 1) + dy * W + dx
            src = ext[:, start:start + blk]                    # (in_c, BLK)
            if dx == -1:
                src = jnp.where(not_first, src, jnp.zeros((), dt))
            elif dx == 1:
                src = jnp.where(not_last, src, jnp.zeros((), dt))
            pieces.append(src)
    if add_ones:
        pieces.append(jnp.ones((1, blk), dt))
    patch = jnp.concatenate(pieces, axis=0)                    # (K, BLK)

    # Single MXU matmul, f32 accumulation; no per-tap VPU accumulate adds.
    acc = jnp.dot(w_ref[...], patch, preferred_element_type=jnp.float32)   # (out_c, BLK)
    o_ref[0] = acc.astype(o_ref.dtype)


def _pick_tile_rows(h, w, out_c, itemsize, batch, max_block_bytes=4 << 20):
    """Row-tile height: lane-dense (th*w % 128 == 0), largest output block under the byte
    budget, minimal H padding, and (for batch == 1) at least 2 tiles for v7x megacore."""
    cands = [th for th in range(1, h + 1) if (th * w) % 128 == 0]
    if not cands:
        return h                                   # whole image: full-dim block, no padding

    def n_tiles(th):
        return -(-h // th)

    def key(th):                                   # least H padding first, then largest tile
        return (n_tiles(th) * th, -th)

    fit = [th for th in cands if out_c * th * w * itemsize <= max_block_bytes]
    pool = fit if fit else [min(cands)]
    th = min(pool, key=key)
    if batch * n_tiles(th) < 2:                    # batch==1 & single tile: split for 2 TCs
        multi = [t for t in pool if n_tiles(t) >= 2]
        if multi:
            th = min(multi, key=key)
    return th


def _pick_halo_chunk(blk, w):
    """Smallest 128-aligned chunk that divides the tile and holds >= one image row."""
    d = 128
    while d <= blk:
        if blk % d == 0 and d >= w:
            return d
        d += 128
    return blk


def overlap_patch_embed_forward(x, weight, bias=None, *, tile_rows=None,
                                max_block_bytes=4 << 20):
    """NCHW 3x3 conv, stride 1, padding 1 (PyTorch Conv2d cross-correlation semantics)."""
    b, in_c, h, w = x.shape
    out_c = weight.shape[0]
    assert weight.shape == (out_c, in_c, 3, 3)

    itemsize = jnp.dtype(x.dtype).itemsize
    th = tile_rows if tile_rows is not None else _pick_tile_rows(
        h, w, out_c, itemsize, b, max_block_bytes)
    nr = -(-h // th)
    h_pad = nr * th
    blk = th * w
    assert blk % 128 == 0 or nr == 1, (
        "row tile must be lane-dense: (tile_rows * W) % 128 == 0, or a single whole-image tile")

    if h_pad != h:
        # Zero rows below the image do not change the 'same'-padded conv on the real rows.
        x = jnp.pad(x, ((0, 0), (0, 0), (0, h_pad - h), (0, 0)))

    x_flat = x.reshape(b, in_c, h_pad * w)         # NCHW stays NCHW; H*W on the lane axis

    # (out_c, in_c, 3, 3) -> (out_c, 9*in_c), K ordered tap-major (t = kh*3 + kw), channel minor;
    # bias folded in as an extra K column against the constant-1 im2col row.
    w2 = jnp.transpose(weight, (0, 2, 3, 1)).reshape(out_c, 9 * in_c).astype(x.dtype)
    if bias is not None:
        w2 = jnp.concatenate([w2, bias.reshape(out_c, 1).astype(x.dtype)], axis=1)
    K = w2.shape[1]

    halo = _pick_halo_chunk(blk, w)                # 128-aligned, divides blk, >= one image row
    cpt = blk // halo                              # halo chunks per row tile
    n_chunks = (h_pad * w) // halo

    in_specs = [
        pl.BlockSpec((1, in_c, halo), lambda i, r: (i, 0, jnp.maximum(r * cpt - 1, 0))),
        pl.BlockSpec((1, in_c, blk), lambda i, r: (i, 0, r)),
        pl.BlockSpec((1, in_c, halo),
                     lambda i, r: (i, 0, jnp.minimum((r + 1) * cpt, n_chunks - 1))),
        pl.BlockSpec((out_c, K), lambda i, r: (0, 0)),
    ]

    # Double-buffered pipeline blocks + in-kernel temporaries (ext / im2col / f32 acc).
    io_bytes = itemsize * (in_c * (blk + 2 * halo) + out_c * blk + out_c * K)
    temp_bytes = itemsize * (2 * K * blk + in_c * (blk + 2 * w + 2)) + 4 * out_c * blk
    vmem_limit = int(min(96 << 20, max(8 << 20, 2 * io_bytes + temp_bytes + (2 << 20))))

    out_flat = pl.pallas_call(
        functools.partial(_conv3x3_kernel, width=w, add_ones=bias is not None),
        grid=(b, nr),
        in_specs=in_specs,
        out_specs=pl.BlockSpec((1, out_c, blk), lambda i, r: (i, 0, r)),
        out_shape=jax.ShapeDtypeStruct((b, out_c, h_pad * w), x.dtype),
        compiler_params=pltpu.CompilerParams(
            dimension_semantics=("parallel", "parallel"),
            vmem_limit_bytes=vmem_limit,
        ),
    )(x_flat, x_flat, x_flat, w2)

    out = out_flat.reshape(b, out_c, h_pad, w)
    if h_pad != h:
        out = out[:, :, :h, :]
    return out


if __name__ == "__main__":
    in_c, embed_dim = 3, 48            # OverlapPatchEmbed defaults: in_c=3, embed_dim=48, bias=False
    b, h, w = 2, 16, 16

    key = jax.random.PRNGKey(0)
    kx, kw_, kb = jax.random.split(key, 3)
    x = jax.random.normal(kx, (b, in_c, h, w), jnp.float32)
    weight = 0.2 * jax.random.normal(kw_, (embed_dim, in_c, 3, 3), jnp.float32)
    bias = 0.1 * jax.random.normal(kb, (embed_dim,), jnp.float32)

    def ref_conv(xv, wv, bv=None):
        y = jax.lax.conv_general_dilated(
            xv, wv, window_strides=(1, 1), padding=((1, 1), (1, 1)),
            dimension_numbers=("NCHW", "OIHW", "NCHW"),
            precision=jax.lax.Precision.HIGHEST)
        if bv is not None:
            y = y + bv[None, :, None, None]
        return y

    checks = []

    # 1) module default (bias=False), auto tile selection (single whole-image tile here).
    ref = ref_conv(x, weight)
    out = jax.block_until_ready(overlap_patch_embed_forward(x, weight))
    assert out.shape == (b, embed_dim, h, w)
    checks.append(("f32/auto", float(jnp.max(jnp.abs(out - ref))), 1e-1))

    # 2) forced 2 row tiles -> exercises the halo path, plus the folded-bias path.
    ref_b = ref_conv(x, weight, bias)
    out_b = jax.block_until_ready(overlap_patch_embed_forward(x, weight, bias, tile_rows=8))
    checks.append(("f32/tiled+bias", float(jnp.max(jnp.abs(out_b - ref_b))), 1e-1))

    # 3) batch=1 with H not a multiple of the tile -> exercises H padding and the
    #    ">= 2 grid points" megacore rule.
    x_odd = x[:1, :, :12, :]
    ref_o = ref_conv(x_odd, weight)
    out_o = jax.block_until_ready(overlap_patch_embed_forward(x_odd, weight))
    assert out_o.shape == (1, embed_dim, 12, w)
    checks.append(("f32/odd-H", float(jnp.max(jnp.abs(out_o - ref_o))), 1e-1))

    # 4) bf16 I/O (recommended for mem-bound perf), f32 MXU accumulation inside the kernel.
    x_bf = x.astype(jnp.bfloat16)
    ref_bf = ref_conv(x_bf.astype(jnp.float32),
                      weight.astype(jnp.bfloat16).astype(jnp.float32))
    out_bf = jax.block_until_ready(
        overlap_patch_embed_forward(x_bf, weight, tile_rows=8)).astype(jnp.float32)
    checks.append(("bf16/tiled", float(jnp.max(jnp.abs(out_bf - ref_bf))), 1.5e-1))

    bad = [(name, err) for name, err, tol in checks if not (err < tol)]
    if not bad:
        print("KERNEL_OK")
    else:
        for name, err in bad:
            print("MISMATCH", name, "max_abs_err =", err)
</pallas_src>

<mosaic_0001>
module attributes {stable_mosaic.version = 11 : i64} {
  func.func @_conv3x3_kernel(%arg0: i32, %arg1: i32, %arg2: memref<1x3x128xf32, #tpu.memory_space<vmem>>, %arg3: memref<1x3x256xf32, #tpu.memory_space<vmem>>, %arg4: memref<1x3x128xf32, #tpu.memory_space<vmem>>, %arg5: memref<48x27xf32, #tpu.memory_space<vmem>>, %arg6: memref<1x48x256xf32, #tpu.memory_space<vmem>>) attributes {dimension_semantics = [#tpu.dimension_semantics<parallel>, #tpu.dimension_semantics<parallel>], iteration_bounds = array<i64: 2, 1>, scalar_prefetch = 0 : i64, scratch_operands = 0 : i64, tpu.core_type = #tpu.core_type<tc>, window_params = [{transform_indices = @transform_0, window_bounds = array<i64: 1, 3, 128>}, {transform_indices = @transform_1, window_bounds = array<i64: 1, 3, 256>}, {transform_indices = @transform_2, window_bounds = array<i64: 1, 3, 128>}, {pipeline_mode = #tpu.pipeline_mode<synchronous>, transform_indices = @transform_3, window_bounds = array<i64: 48, 27>}, {transform_indices = @transform_4, window_bounds = array<i64: 1, 48, 256>}]} {
    %c0 = arith.constant 0 : index
    %c0_0 = arith.constant 0 : index
    %c0_1 = arith.constant 0 : index
    %0 = vector.load %arg3[%c0, %c0_0, %c0_1] : memref<1x3x256xf32, #tpu.memory_space<vmem>>, vector<1x3x256xf32>
    %1 = vector.shape_cast %0 : vector<1x3x256xf32> to vector<3x256xf32>
    %c0_2 = arith.constant 0 : index
    %c0_3 = arith.constant 0 : index
    %c112 = arith.constant 112 : index
    %2 = vector.load %arg2[%c0_2, %c0_3, %c112] : memref<1x3x128xf32, #tpu.memory_space<vmem>>, vector<1x3x16xf32>
    %3 = vector.shape_cast %2 : vector<1x3x16xf32> to vector<3x16xf32>
    %c0_4 = arith.constant 0 : index
    %c0_5 = arith.constant 0 : index
    %c0_6 = arith.constant 0 : index
    %4 = vector.load %arg4[%c0_4, %c0_5, %c0_6] : memref<1x3x128xf32, #tpu.memory_space<vmem>>, vector<1x3x16xf32>
    %5 = vector.shape_cast %4 : vector<1x3x16xf32> to vector<3x16xf32>
    %cst = arith.constant 0.000000e+00 : f32
    %6 = vector.broadcast %cst : f32 to vector<3x16xf32>
    %c0_i32 = arith.constant 0 : i32
    %7 = arith.cmpi sgt, %arg1, %c0_i32 : i32
    %8 = arith.select %7, %3, %6 : vector<3x16xf32>
    %c0_i32_7 = arith.constant 0 : i32
    %9 = arith.cmpi slt, %arg1, %c0_i32_7 : i32
    %10 = arith.select %9, %5, %6 : vector<3x16xf32>
    %cst_8 = arith.constant 0.000000e+00 : f32
    %11 = vector.broadcast %cst_8 : f32 to vector<3x1xf32>
    %12 = tpu.concatenate %11, %8, %1, %10, %11 in 1 : vector<3x1xf32>, vector<3x16xf32>, vector<3x256xf32>, vector<3x16xf32>, vector<3x1xf32> -> vector<3x290xf32>
    %13 = tpu.iota {dimensions = array<i32: 1>} : vector<1x256xi32>
    %c16_i32 = arith.constant 16 : i32
    %c0_i32_9 = arith.constant 0 : i32
    %14 = arith.cmpi eq, %c16_i32, %c0_i32_9 : i32
    %c1_i32 = arith.constant 1 : i32
    %15 = arith.select %14, %c1_i32, %c16_i32 : i32
    %16 = vector.broadcast %15 : i32 to vector<1x256xi32>
    %17 = arith.remsi %13, %16 : vector<1x256xi32>
    %c0_i32_10 = arith.constant 0 : i32
    %18 = vector.broadcast %c0_i32_10 : i32 to vector<1x256xi32>
    %19 = arith.cmpi ne, %17, %18 : vector<1x256xi32>
    %c0_i32_11 = arith.constant 0 : i32
    %20 = vector.broadcast %c0_i32_11 : i32 to vector<1x256xi32>
    %21 = arith.cmpi slt, %17, %20 : vector<1x256xi32>
    %c0_i32_12 = arith.constant 0 : i32
    %22 = arith.cmpi slt, %15, %c0_i32_12 : i32
    %23 = vector.broadcast %22 : i1 to vector<1x256xi1>
    %24 = vector.broadcast %23 : vector<1x256xi1> to vector<1x256xi1>
    %25 = arith.xori %21, %24 : vector<1x256xi1>
    %26 = arith.andi %25, %19 : vector<1x256xi1>
    %27 = vector.broadcast %15 : i32 to vector<1x256xi32>
    %28 = arith.addi %17, %27 : vector<1x256xi32>
    %29 = arith.select %26, %28, %17 : vector<1x256xi1>, vector<1x256xi32>
    %c0_i32_13 = arith.constant 0 : i32
    %30 = vector.broadcast %c0_i32_13 : i32 to vector<1x256xi32>
    %31 = arith.cmpi ne, %29, %30 : vector<1x256xi32>
    %c15_i32 = arith.constant 15 : i32
    %32 = vector.broadcast %c15_i32 : i32 to vector<1x256xi32>
    %33 = arith.cmpi ne, %29, %32 : vector<1x256xi32>
    %34 = vector.extract_strided_slice %12 {offsets = [0, 0], sizes = [3, 256], strides = [1, 1]} : vector<3x290xf32> to vector<3x256xf32>
    %cst_14 = arith.constant 0.000000e+00 : f32
    %35 = vector.shape_cast %31 : vector<1x256xi1> to vector<1x256xi1>
    %36 = vector.broadcast %35 : vector<1x256xi1> to vector<3x256xi1>
    %37 = vector.broadcast %cst_14 : f32 to vector<3x256xf32>
    %38 = arith.select %36, %34, %37 : vector<3x256xi1>, vector<3x256xf32>
    %39 = vector.extract_strided_slice %12 {offsets = [0, 1], sizes = [3, 256], strides = [1, 1]} : vector<3x290xf32> to vector<3x256xf32>
    %40 = vector.extract_strided_slice %12 {offsets = [0, 2], sizes = [3, 256], strides = [1, 1]} : vector<3x290xf32> to vector<3x256xf32>
    %cst_15 = arith.constant 0.000000e+00 : f32
    %41 = vector.shape_cast %33 : vector<1x256xi1> to vector<1x256xi1>
    %42 = vector.broadcast %41 : vector<1x256xi1> to vector<3x256xi1>
    %43 = vector.broadcast %cst_15 : f32 to vector<3x256xf32>
    %44 = arith.select %42, %40, %43 : vector<3x256xi1>, vector<3x256xf32>
    %45 = vector.extract_strided_slice %12 {offsets = [0, 16], sizes = [3, 256], strides = [1, 1]} : vector<3x290xf32> to vector<3x256xf32>
    %cst_16 = arith.constant 0.000000e+00 : f32
    %46 = vector.shape_cast %31 : vector<1x256xi1> to vector<1x256xi1>
    %47 = vector.broadcast %46 : vector<1x256xi1> to vector<3x256xi1>
    %48 = vector.broadcast %cst_16 : f32 to vector<3x256xf32>
    %49 = arith.select %47, %45, %48 : vector<3x256xi1>, vector<3x256xf32>
    %50 = vector.extract_strided_slice %12 {offsets = [0, 17], sizes = [3, 256], strides = [1, 1]} : vector<3x290xf32> to vector<3x256xf32>
    %51 = vector.extract_strided_slice %12 {offsets = [0, 18], sizes = [3, 256], strides = [1, 1]} : vector<3x290xf32> to vector<3x256xf32>
    %cst_17 = arith.constant 0.000000e+00 : f32
    %52 = vector.shape_cast %33 : vector<1x256xi1> to vector<1x256xi1>
    %53 = vector.broadcast %52 : vector<1x256xi1> to vector<3x256xi1>
    %54 = vector.broadcast %cst_17 : f32 to vector<3x256xf32>
    %55 = arith.select %53, %51, %54 : vector<3x256xi1>, vector<3x256xf32>
    %56 = vector.extract_strided_slice %12 {offsets = [0, 32], sizes = [3, 256], strides = [1, 1]} : vector<3x290xf32> to vector<3x256xf32>
    %cst_18 = arith.constant 0.000000e+00 : f32
    %57 = vector.shape_cast %31 : vector<1x256xi1> to vector<1x256xi1>
    %58 = vector.broadcast %57 : vector<1x256xi1> to vector<3x256xi1>
    %59 = vector.broadcast %cst_18 : f32 to vector<3x256xf32>
    %60 = arith.select %58, %56, %59 : vector<3x256xi1>, vector<3x256xf32>
    %61 = vector.extract_strided_slice %12 {offsets = [0, 33], sizes = [3, 256], strides = [1, 1]} : vector<3x290xf32> to vector<3x256xf32>
    %62 = vector.extract_strided_slice %12 {offsets = [0, 34], sizes = [3, 256], strides = [1, 1]} : vector<3x290xf32> to vector<3x256xf32>
    %cst_19 = arith.constant 0.000000e+00 : f32
    %63 = vector.shape_cast %33 : vector<1x256xi1> to vector<1x256xi1>
    %64 = vector.broadcast %63 : vector<1x256xi1> to vector<3x256xi1>
    %65 = vector.broadcast %cst_19 : f32 to vector<3x256xf32>
    %66 = arith.select %64, %62, %65 : vector<3x256xi1>, vector<3x256xf32>
    %67 = tpu.concatenate %38, %39, %44, %49, %50, %55, %60, %61, %66 in 0 : vector<3x256xf32>, vector<3x256xf32>, vector<3x256xf32>, vector<3x256xf32>, vector<3x256xf32>, vector<3x256xf32>, vector<3x256xf32>, vector<3x256xf32>, vector<3x256xf32> -> vector<27x256xf32>
    %c0_20 = arith.constant 0 : index
    %c0_21 = arith.constant 0 : index
    %68 = vector.load %arg5[%c0_20, %c0_21] : memref<48x27xf32, #tpu.memory_space<vmem>>, vector<48x27xf32>
    %cst_22 = arith.constant dense<0.000000e+00> : vector<48x256xf32>
    %69 = tpu.matmul %68, %67, %cst_22 {dimension_numbers = #tpu.dot_dimension_numbers<[1], [0], [0], [1], [0, 0, 1, 1], [], []>} : vector<48x27xf32>, vector<27x256xf32>, vector<48x256xf32> -> vector<48x256xf32>
    %c0_23 = arith.constant 0 : index
    %c0_24 = arith.constant 0 : index
    %c0_25 = arith.constant 0 : index
    %70 = vector.load %arg6[%c0_23, %c0_24, %c0_25] : memref<1x48x256xf32, #tpu.memory_space<vmem>>, vector<1x48x256xf32>
    %71 = vector.shape_cast %70 : vector<1x48x256xf32> to vector<48x256xf32>
    %72 = vector.shape_cast %69 : vector<48x256xf32> to vector<1x48x256xf32>
    tpu.vector_store %arg6[%c0_23, %c0_24, %c0_25], %72 {strides = array<i32>} : memref<1x48x256xf32, #tpu.memory_space<vmem>>, vector<1x48x256xf32>,
    return
  }
  func.func @transform_0(%arg0: i32, %arg1: i32) -> (i32, i32, i32) {
    %c2_i32 = arith.constant 2 : i32
    %0 = arith.muli %arg1, %c2_i32 : i32
    %c1_i32 = arith.constant 1 : i32
    %1 = arith.subi %0, %c1_i32 : i32
    %c0_i32 = arith.constant 0 : i32
    %2 = arith.maxsi %1, %c0_i32 : i32
    %c0_i32_0 = arith.constant 0 : i32
    %c0_i32_1 = arith.constant 0 : i32
    return %arg0, %c0_i32_0, %2 : i32, i32, i32
  }
  func.func @transform_1(%arg0: i32, %arg1: i32) -> (i32, i32, i32) {
    %c0_i32 = arith.constant 0 : i32
    %c0_i32_0 = arith.constant 0 : i32
    return %arg0, %c0_i32, %arg1 : i32, i32, i32
  }
  func.func @transform_2(%arg0: i32, %arg1: i32) -> (i32, i32, i32) {
    %c1_i32 = arith.constant 1 : i32
    %0 = arith.addi %arg1, %c1_i32 : i32
    %c2_i32 = arith.constant 2 : i32
    %1 = arith.muli %0, %c2_i32 : i32
    %c1_i32_0 = arith.constant 1 : i32
    %2 = arith.minsi %1, %c1_i32_0 : i32
    %c0_i32 = arith.constant 0 : i32
    %c0_i32_1 = arith.constant 0 : i32
    return %arg0, %c0_i32, %2 : i32, i32, i32
  }
  func.func @transform_3(%arg0: i32, %arg1: i32) -> (i32, i32) {
    %c0_i32 = arith.constant 0 : i32
    %c0_i32_0 = arith.constant 0 : i32
    %c0_i32_1 = arith.constant 0 : i32
    return %c0_i32, %c0_i32_0 : i32, i32
  }
  func.func @transform_4(%arg0: i32, %arg1: i32) -> (i32, i32, i32) {
    %c0_i32 = arith.constant 0 : i32
    %c0_i32_0 = arith.constant 0 : i32
    return %arg0, %c0_i32, %arg1 : i32, i32, i32
  }
}

</mosaic_0001>

<llo_original>
// kernel: tpu_custom_call.1
$region0: #{tpu_custom_call.1}
  #allocation0 [shape = 'u32[]', space=smem, size = 0x4, offset = 0x4, fixed_abs, tag = 'smem constant byte address 0x4 - core index']
  #allocation1 [shape = 'u32[144,128]{1,0:T(1,128)}', space=vmem, size = 0x12000, scoped, tag = 'internal scratch']
  %s0 = inlined_call_operand.vmem [shape: f32[2,3,256], index: 0, kind: input, shape index: {}]
  %s1 = inlined_call_operand.vmem [shape: f32[2,3,256], index: 1, kind: input, shape index: {}]
  %s2 = inlined_call_operand.vmem [shape: f32[2,3,256], index: 2, kind: input, shape index: {}]
  %s3 = inlined_call_operand.vmem [shape: f32[48,27], index: 3, kind: input, shape index: {}]
  %s4 = inlined_call_operand.hbm [shape: f32[2,48,256], index: 4, kind: output, shape index: {}]
  %s5 = sld [smem:[#allocation0]]
  $region49: #{tpu_custom_call.1} parent=0
    _
  %s7 = ssub.s32 1, %s5
  %s8 = scalar_select 0, %s7, %s5
  $region1: #{tpu_custom_call.1} parent=0
    #allocation2 [shape = 'u8[98304]{0}', space=vmem, size = 0x18000, scoped, tag = 'output window, operand 0']
    #allocation3 [shape = 's32[2]{0}', space=sflag, size = 0x8, scoped, tag = 'scoped memory for tpu_custom_call.1']
    %9 = vsyncpa [#allocation3], 0
    %s10 = scalar_lea.sflag [#allocation3], 1
    %11 = vsyncpa %s10, 0
    loop: start=0, step=1, limit=4
    $region2: #{tpu_custom_call.1} parent=1 // loop_pre_header
      _
    $region3: #{tpu_custom_call.1} parent=1 // loop_header
      %s13 = sphi 0, %s17
      %p14 = scmp.ge.s32.totalorder %s13, 4
      %s20 = sphi 0, %s32
      %s21 = sphi 0, %s28
      %s22 = sphi 0, %s20
      %s23 = sphi 0, %s21
      %s24 = sphi 0, %s22
      %s25 = sphi 0, %s23
      %s45 = sphi 0, %s47
      %s48 = sphi 0, %s45
      %s49 = sphi 0, %s48
      %s65 = sphi 0, %s49
      %s73 = sphi 0, %s75
      %s76 = sphi 0, %s73
      %s77 = sphi 0, %s76
      %s93 = sphi 0, %s77
      %s109 = sphi 0, %s111
      %s112 = sphi 0, %s109
      %s113 = sphi 0, %s112
      %s129 = sphi 0, %s113
      %s133 = sphi 0, %s133
      %s135 = sphi 0, %s133
      %s136 = sphi 0, %s135
      %s150 = sphi 0, %s136
      %s158 = sphi 0, %s160
      %s161 = sphi 0, %s158
      %s162 = sphi 0, %s161
      %s178 = sphi 0, %s162
    $region4: #{tpu_custom_call.1} parent=1 // loop_header_branch
      %16 = sbr.rel (%p14) target = $region8
    $region5: #{tpu_custom_call.1} parent=1 // loop_body
      %s18 = ssub.s32 %s13, 1
      %s19 = ssub.s32 %s13, 2
      %s26 = sadd.s32 1, %s21
      %p27 = scmp.ge.s32.totalorder %s26, 1
      %s28 = scalar_select %p27, 0, %s26
      %s29 = sadd.s32 1, %s20
      %s30 = scalar_select %p27, %s29, %s20
      %p31 = scmp.ge.s32.totalorder %s30, 2
      %s32 = scalar_select %p31, 0, %s30
      %s33 = smul.u32 %s21, 2
      %s34 = ssub.s32 %s33, 1
      %p35 = scmp.gt.s32.totalorder %s34, 0
      %s36 = scalar_select %p35, %s34, 0
      %s37 = smul.u32 %s28, 2
      %s38 = ssub.s32 %s37, 1
      %p39 = scmp.gt.s32.totalorder %s38, 0
      %s40 = scalar_select %p39, %s38, 0
      %s41 = ssub.s32 %s20, %s32
      %s42 = ssub.s32 %s36, %s40
      %s43 = sor.u32 %s41, %s42
      %p44 = scmp.eq.s32.totalorder %s43, 0
      %s46 = sadd.s32 %s45, 1
      %s47 = scalar_select %p44, %s45, %s46
      %p50 = pneg %p44
      %p51 = scmp.eq.s32.totalorder %s13, 1
      %p52 = por %p50, %p51
      %p53 = scmp.ne.s32.totalorder %s45, %s48
      %p54 = scmp.eq.s32.totalorder %s13, 0
      %p55 = por %p53, %p54
      %p56 = scmp.ne.s32.totalorder %s45, %s48
      %p57 = scmp.eq.s32.totalorder %s18, 1
      %p58 = por %p56, %p57
      %p59 = scmp.ne.s32.totalorder %s48, %s49
      %p60 = scmp.eq.s32.totalorder %s18, 0
      %p61 = por %p59, %p60
      %p62 = scmp.ne.s32.totalorder %s48, %s49
      %p63 = scmp.eq.s32.totalorder %s19, 1
      %p64 = por %p62, %p63
      %p66 = scmp.ne.s32.totalorder %s49, %s65
      %p67 = scmp.eq.s32.totalorder %s19, 0
      %p68 = por %p66, %p67
      %s69 = ssub.s32 %s20, %s32
      %s70 = ssub.s32 %s21, %s28
      %s71 = sor.u32 %s69, %s70
      %p72 = scmp.eq.s32.totalorder %s71, 0
      %s74 = sadd.s32 %s73, 1
      %s75 = scalar_select %p72, %s73, %s74
      %p78 = pneg %p72
      %p79 = scmp.eq.s32.totalorder %s13, 1
      %p80 = por %p78, %p79
      %p81 = scmp.ne.s32.totalorder %s73, %s76
      %p82 = scmp.eq.s32.totalorder %s13, 0
      %p83 = por %p81, %p82
      %p84 = scmp.ne.s32.totalorder %s73, %s76
      %p85 = scmp.eq.s32.totalorder %s18, 1
      %p86 = por %p84, %p85
      %p87 = scmp.ne.s32.totalorder %s76, %s77
      %p88 = scmp.eq.s32.totalorder %s18, 0
      %p89 = por %p87, %p88
      %p90 = scmp.ne.s32.totalorder %s76, %s77
      %p91 = scmp.eq.s32.totalorder %s19, 1
      %p92 = por %p90, %p91
      %p94 = scmp.ne.s32.totalorder %s77, %s93
      %p95 = scmp.eq.s32.totalorder %s19, 0
      %p96 = por %p94, %p95
      %s97 = sadd.s32 %s21, 1
      %s98 = smul.u32 %s97, 2
      %p99 = scmp.lt.s32.totalorder %s98, 1
      %s100 = scalar_select %p99, %s98, 1
      %s101 = sadd.s32 %s28, 1
      %s102 = smul.u32 %s101, 2
      %p103 = scmp.lt.s32.totalorder %s102, 1
      %s104 = scalar_select %p103, %s102, 1
      %s105 = ssub.s32 %s20, %s32
      %s106 = ssub.s32 %s100, %s104
      %s107 = sor.u32 %s105, %s106
      %p108 = scmp.eq.s32.totalorder %s107, 0
      %s110 = sadd.s32 %s109, 1
      %s111 = scalar_select %p108, %s109, %s110
      %p114 = pneg %p108
      %p115 = scmp.eq.s32.totalorder %s13, 1
      %p116 = por %p114, %p115
      %p117 = scmp.ne.s32.totalorder %s109, %s112
      %p118 = scmp.eq.s32.totalorder %s13, 0
      %p119 = por %p117, %p118
      %p120 = scmp.ne.s32.totalorder %s109, %s112
      %p121 = scmp.eq.s32.totalorder %s18, 1
      %p122 = por %p120, %p121
      %p123 = scmp.ne.s32.totalorder %s112, %s113
      %p124 = scmp.eq.s32.totalorder %s18, 0
      %p125 = por %p123, %p124
      %p126 = scmp.ne.s32.totalorder %s112, %s113
      %p127 = scmp.eq.s32.totalorder %s19, 1
      %p128 = por %p126, %p127
      %p130 = scmp.ne.s32.totalorder %s113, %s129
      %p131 = scmp.eq.s32.totalorder %s19, 0
      %p132 = por %p130, %p131
      %s134 = sadd.s32 %s133, 1
      %p137 = scmp.eq.s32.totalorder %s13, 1
      %p138 = scmp.ne.s32.totalorder %s133, %s135
      %p139 = scmp.eq.s32.totalorder %s13, 0
      %p140 = por %p138, %p139
      %p141 = scmp.ne.s32.totalorder %s133, %s135
      %p142 = scmp.eq.s32.totalorder %s18, 1
      %p143 = por %p141, %p142
      %p144 = scmp.ne.s32.totalorder %s135, %s136
      %p145 = scmp.eq.s32.totalorder %s18, 0
      %p146 = por %p144, %p145
      %p147 = scmp.ne.s32.totalorder %s135, %s136
      %p148 = scmp.eq.s32.totalorder %s19, 1
      %p149 = por %p147, %p148
      %p151 = scmp.ne.s32.totalorder %s136, %s150
      %p152 = scmp.eq.s32.totalorder %s19, 0
      %p153 = por %p151, %p152
      %s154 = ssub.s32 %s20, %s32
      %s155 = ssub.s32 %s21, %s28
      %s156 = sor.u32 %s154, %s155
      %p157 = scmp.eq.s32.totalorder %s156, 0
      %s159 = sadd.s32 %s158, 1
      %s160 = scalar_select %p157, %s158, %s159
      %p163 = pneg %p157
      %p164 = scmp.eq.s32.totalorder %s13, 1
      %p165 = por %p163, %p164
      %p166 = scmp.ne.s32.totalorder %s158, %s161
      %p167 = scmp.eq.s32.totalorder %s13, 0
      %p168 = por %p166, %p167
      %p169 = scmp.ne.s32.totalorder %s158, %s161
      %p170 = scmp.eq.s32.totalorder %s18, 1
      %p171 = por %p169, %p170
      %p172 = scmp.ne.s32.totalorder %s161, %s162
      %p173 = scmp.eq.s32.totalorder %s18, 0
      %p174 = por %p172, %p173
      %p175 = scmp.ne.s32.totalorder %s161, %s162
      %p176 = scmp.eq.s32.totalorder %s19, 1
      %p177 = por %p175, %p176
      %p179 = scmp.ne.s32.totalorder %s162, %s178
      %p180 = scmp.eq.s32.totalorder %s19, 0
      %p181 = por %p179, %p180
      %p182 = scmp.le.s32.totalorder 1, %s13
      %p183 = scmp.lt.s32.totalorder %s13, 3
      %p184 = pnand %p182, %p183
      %p185 = pneg %p184
      // Predicated region
      $region9: #{tpu_custom_call.1} parent=5 // pred_check
        _
      $region10: #{tpu_custom_call.1} parent=5 // pred_check_branch
        %187 = sbr.rel (%p184) target = $region12
      $region11: #{tpu_custom_call.1} parent=5 // pred_region
        %s188 = ssub.s32 %s13, 1
        // Predicated region
        $region13: #{tpu_custom_call.1} parent=11 // pred_check
          %p189 = pneg %p146
        $region14: #{tpu_custom_call.1} parent=11 // pred_check_branch
          %191 = sbr.rel (%p189) target = $region16
        $region15: #{tpu_custom_call.1} parent=11 // pred_region
          _
        $region16: #{tpu_custom_call.1} parent=11 // pred_fallthru
          _
      $region12: #{tpu_custom_call.1} parent=5 // pred_fallthru
        _
      %p192 = scmp.lt.s32.totalorder %s13, 2
      // Predicated region
      $region17: #{tpu_custom_call.1} parent=5 // pred_check
        %p193 = pneg %p192
      $region18: #{tpu_custom_call.1} parent=5 // pred_check_branch
        %195 = sbr.rel (%p193) target = $region20
      $region19: #{tpu_custom_call.1} parent=5 // pred_region
        // Predicated region
        $region21: #{tpu_custom_call.1} parent=19 // pred_check
          %p196 = pneg %p55
        $region22: #{tpu_custom_call.1} parent=19 // pred_check_branch
          %198 = sbr.rel (%p196) target = $region24
        $region23: #{tpu_custom_call.1} parent=19 // pred_region
          %s199 = smul.u32 %s21, 2
          %s200 = ssub.s32 %s199, 1
          %p201 = scmp.gt.s32.totalorder %s200, 0
          %s202 = scalar_select %p201, %s200, 0
          %p203 = scmp.lt.s32.totalorder %s20, 1
          %s204 = scalar_select %p203, %s20, 1
          %p205 = scmp.lt.s32.totalorder %s202, 1
          %s206 = scalar_select %p205, %s202, 1
          %s207 = smul.addr %s204, 2
          %s208 = sadd.s32 %s206, %s207
          %s209 = smul.addr %s208, 4
          %s210 = scalar_lea.vmem %s0, %s209
          %s211 = smul.u32 %s21, 2
          %s212 = ssub.s32 %s211, 1
          %p213 = scmp.gt.s32.totalorder %s212, 0
          %s214 = scalar_select %p213, %s212, 0
        $region24: #{tpu_custom_call.1} parent=19 // pred_fallthru
          _
        // Predicated region
        $region25: #{tpu_custom_call.1} parent=19 // pred_check
          %p215 = pneg %p83
        $region26: #{tpu_custom_call.1} parent=19 // pred_check_branch
          %217 = sbr.rel (%p215) target = $region28
        $region27: #{tpu_custom_call.1} parent=19 // pred_region
          %s218 = smul.u32 2, %s21
          %p219 = scmp.lt.s32.totalorder %s20, 1
          %s220 = scalar_select %p219, %s20, 1
          %p221 = scmp.lt.s32.totalorder %s218, 1
          %s222 = scalar_select %p221, %s218, 1
          %s223 = smul.addr %s220, 2
          %s224 = sadd.s32 %s222, %s223
          %s225 = smul.addr %s224, 4
          %s226 = scalar_lea.vmem %s1, %s225
          %s227 = smul.u32 2, %s21
        $region28: #{tpu_custom_call.1} parent=19 // pred_fallthru
          _
        // Predicated region
        $region29: #{tpu_custom_call.1} parent=19 // pred_check
          %p228 = pneg %p119
        $region30: #{tpu_custom_call.1} parent=19 // pred_check_branch
          %230 = sbr.rel (%p228) target = $region32
        $region31: #{tpu_custom_call.1} parent=19 // pred_region
          %s231 = sadd.s32 %s21, 1
          %s232 = smul.u32 %s231, 2
          %p233 = scmp.lt.s32.totalorder %s232, 1
          %s234 = scalar_select %p233, %s232, 1
          %p235 = scmp.lt.s32.totalorder %s20, 1
          %s236 = scalar_select %p235, %s20, 1
          %p237 = scmp.lt.s32.totalorder %s234, 1
          %s238 = scalar_select %p237, %s234, 1
          %s239 = smul.addr %s236, 2
          %s240 = sadd.s32 %s238, %s239
          %s241 = smul.addr %s240, 4
          %s242 = scalar_lea.vmem %s2, %s241
          %s243 = sadd.s32 %s21, 1
          %s244 = smul.u32 %s243, 2
          %p245 = scmp.lt.s32.totalorder %s244, 1
          %s246 = scalar_select %p245, %s244, 1
        $region32: #{tpu_custom_call.1} parent=19 // pred_fallthru
          _
      $region20: #{tpu_custom_call.1} parent=5 // pred_fallthru
        _
      %p247 = scmp.le.s32.totalorder 1, %s13
      %p248 = scmp.lt.s32.totalorder %s13, 3
      %p249 = pnand %p247, %p248
      %p250 = pneg %p249
      // Predicated region
      $region33: #{tpu_custom_call.1} parent=5 // pred_check
        _
      $region34: #{tpu_custom_call.1} parent=5 // pred_check_branch
        %252 = sbr.rel (%p249) target = $region36
      $region35: #{tpu_custom_call.1} parent=5 // pred_region
        %s253 = ssub.s32 %s13, 1
        %s254 = smul.u32 %s23, 2
        %s255 = ssub.s32 %s254, 1
        %p256 = scmp.gt.s32.totalorder %s255, 0
        %s257 = scalar_select %p256, %s255, 0
        %p258 = scmp.lt.s32.totalorder %s22, 1
        %s259 = scalar_select %p258, %s22, 1
        %p260 = scmp.lt.s32.totalorder %s257, 1
        %s261 = scalar_select %p260, %s257, 1
        %s262 = smul.addr %s259, 2
        %s263 = sadd.s32 %s261, %s262
        %s264 = smul.addr %s263, 4
        %s265 = scalar_lea.vmem %s0, %s264
        %p266 = pneg %p61
        %p267 = pneg %p58
        %s268 = smul.u32 2, %s23
        %p269 = scmp.lt.s32.totalorder %s22, 1
        %s270 = scalar_select %p269, %s22, 1
        %p271 = scmp.lt.s32.totalorder %s268, 1
        %s272 = scalar_select %p271, %s268, 1
        %s273 = smul.addr %s270, 2
        %s274 = sadd.s32 %s272, %s273
        %s275 = smul.addr %s274, 4
        %s276 = scalar_lea.vmem %s1, %s275
        %p277 = pneg %p89
        %p278 = pneg %p86
        %s279 = sadd.s32 %s23, 1
        %s280 = smul.u32 %s279, 2
        %p281 = scmp.lt.s32.totalorder %s280, 1
        %s282 = scalar_select %p281, %s280, 1
        %p283 = scmp.lt.s32.totalorder %s22, 1
        %s284 = scalar_select %p283, %s22, 1
        %p285 = scmp.lt.s32.totalorder %s282, 1
        %s286 = scalar_select %p285, %s282, 1
        %s287 = smul.addr %s284, 2
        %s288 = sadd.s32 %s286, %s287
        %s289 = smul.addr %s288, 4
        %s290 = scalar_lea.vmem %s2, %s289
        %p291 = pneg %p125
        %p292 = pneg %p122
        %p293 = pneg %p146
        %p294 = pneg %p143
        %p295 = pneg %p174
        %p296 = pneg %p171
        %s297 = sand.u32 %s161, 1
        %s298 = scalar_lea.sflag [#allocation3], %s297
        %s299 = sand.u32 %s161, 1
        %s300 = smul.addr %s299, 96
        %s301 = scalar_lea.vmem [#allocation2], %s300
        %s302 = smul.u32 %s23, 2
        %s303 = ssub.s32 %s302, 1
        %p304 = scmp.gt.s32.totalorder %s303, 0
        %s305 = scalar_select %p304, %s303, 0
        %p306 = scmp.lt.s32.totalorder %s22, 1
        %s307 = scalar_select %p306, %s22, 1
        %p308 = scmp.lt.s32.totalorder %s305, 1
        %s309 = scalar_select %p308, %s305, 1
        %s310 = smul.addr %s307, 2
        %s311 = sadd.s32 %s309, %s310
        %s312 = smul.addr %s311, 4
        %s313 = scalar_lea.vmem %s0, %s312
        %s314 = smul.u32 %s23, 2
        %s315 = ssub.s32 %s314, 1
        %p316 = scmp.gt.s32.totalorder %s315, 0
        %s317 = scalar_select %p316, %s315, 0
        %s318 = smul.u32 2, %s23
        %p319 = scmp.lt.s32.totalorder %s22, 1
        %s320 = scalar_select %p319, %s22, 1
        %p321 = scmp.lt.s32.totalorder %s318, 1
        %s322 = scalar_select %p321, %s318, 1
        %s323 = smul.addr %s320, 2
        %s324 = sadd.s32 %s322, %s323
        %s325 = smul.addr %s324, 4
        %s326 = scalar_lea.vmem %s1, %s325
        %s327 = smul.u32 2, %s23
        %s328 = sadd.s32 %s23, 1
        %s329 = smul.u32 %s328, 2
        %p330 = scmp.lt.s32.totalorder %s329, 1
        %s331 = scalar_select %p330, %s329, 1
        %p332 = scmp.lt.s32.totalorder %s22, 1
        %s333 = scalar_select %p332, %s22, 1
        %p334 = scmp.lt.s32.totalorder %s331, 1
        %s335 = scalar_select %p334, %s331, 1
        %s336 = smul.addr %s333, 2
        %s337 = sadd.s32 %s335, %s336
        %s338 = smul.addr %s337, 4
        %s339 = scalar_lea.vmem %s2, %s338
        %s340 = sadd.s32 %s23, 1
        %s341 = smul.u32 %s340, 2
        %p342 = scmp.lt.s32.totalorder %s341, 1
        %s343 = scalar_select %p342, %s341, 1
        %s344 = smul.u32 2, %s23
        %v345 = vld [vmem:[%s326] sm:$0x77]
        %v346 = vld [vmem:[%s313] sm:$0x7]
        %v347 = vld [vmem:[%s339] sm:$0x7]
        %p348 = scmp.gt.s32.totalorder %s23, 0
        %s349 = scalar_select %p348, 1, 0
        %v350 = vstv %s349
        %vm351 = vcmp.eq.s32.totalorder %v350, 1
        %v352 = vsel %vm351, %v346, 0.0
        %p353 = scmp.lt.s32.totalorder %s23, 0
        %s354 = scalar_select %p353, 1, 0
        %v355 = vstv %s354
        %vm356 = vcmp.eq.s32.totalorder %v355, 1
        %v357 = vsel %vm356, %v347, 0.0
        %359 = vrot.lane.b32.xlu0 %v352, 17
        %v360 = vpop.permute.xlu0 %359
        %v363 = vcombine.high %v345, %v345
        %364 = vrot.lane.b32.xlu0 %v345, 17
        %v365 = vpop.permute.xlu0 %364
        %366 = vrot.lane.b32.xlu0 %v363, 17
        %v367 = vpop.permute.xlu0 %366
        %vm368 = vcmask 138240
        %v369 = vsel %vm368, %v365, %v367
        %374 = vrot.lane.b32.xlu0 %v357, 17
        %v375 = vpop.permute.xlu0 %374
        %vm377 = vcmask 7168
        %v378 = vsel %vm377, 0.0, %v360
        %v379 = vsel %vm368, %v378, %v365
        %v380 = vsel %vm368, %v367, %v375
        %vm381 = vcmask 269312
        %v382 = vsel %vm381, %v380, 0.0
        %v383 = vlaneseq
        %v384 = vand.u32 %v383, 127
        %v385 = vadd.s32 %v384, 128
        %vm386 = vcmp.lt.s32.totalorder %v384, 0
        %v387 = vsub.s32 0, %v384
        %v388 = vsel %vm386, %v387, %v384
        %v389 = vshrl.u32 %v388, 4
        %v390 = vand.u32 %v388, 15
        %v391 = vsub.s32 0, %v390
        %v392 = vsel %vm386, %v391, %v390
        %vm393 = vcmp.lt.s32.totalorder %v385, 0
        %v394 = vsub.s32 0, %v385
        %v395 = vsel %vm393, %v394, %v385
        %v396 = vshrl.u32 %v395, 4
        %v397 = vand.u32 %v395, 15
        %v398 = vsub.s32 0, %v397
        %v399 = vsel %vm393, %v398, %v397
        %vm400 = vcmp.ne.s32.totalorder %v392, 0
        %vm401 = vcmp.ne.s32.totalorder %v399, 0
        %vm402 = vcmp.lt.s32.totalorder %v392, 0
        %vm403 = vcmp.lt.s32.totalorder %v399, 0
        %vm404 = vmand %vm402, %vm400
        %vm405 = vmand %vm403, %vm401
        %v406 = vadd.s32 %v392, 16
        %v407 = vadd.s32 %v399, 16
        %v408 = vsel %vm404, %v406, %v392
        %v409 = vsel %vm405, %v407, %v399
        %vm410 = vcmp.ne.s32.totalorder %v408, 0
        %vm411 = vcmp.ne.s32.totalorder %v409, 0
        %vm412 = vcmp.ne.s32.totalorder %v408, 15
        %vm413 = vcmp.ne.s32.totalorder %v409, 15
        %v414 = vsel %vm410, 1, 0
        %v415 = vsel %vm411, 1, 0
        %vm416 = vcmp.eq.s32.totalorder %v414, 1
        %vm417 = vcmp.eq.s32.totalorder %v415, 1
        %v418 = vsel %vm416, %v379, 0.0
        %v419 = vsel %vm417, %v369, 0.0
        %v420 = vsel %vm412, 1, 0
        %v421 = vsel %vm413, 1, 0
        %vm422 = vcmp.eq.s32.totalorder %v420, 1
        %vm423 = vcmp.eq.s32.totalorder %v421, 1
        %426 = vrot.lane.b32.xlu0 %v379, 126
        %v427 = vpop.permute.xlu0 %426
        %428 = vrot.lane.b32.xlu0 %v369, 126
        %v429 = vpop.permute.xlu0 %428
        %430 = vrot.lane.b32.xlu0 %v382, 126
        %v431 = vpop.permute.xlu0 %430
        %vm432 = vcmask 1031168
        %v433 = vsel %vm432, %v427, %v429
        %v434 = vsel %vm432, %v429, %v431
        %v437 = vsel %vm422, %v433, 0.0
        %v438 = vsel %vm423, %v434, 0.0
        %439 = vrot.lane.b32.xlu0 %v379, 112
        %v440 = vpop.permute.xlu0 %439
        %441 = vrot.lane.b32.xlu0 %v369, 112
        %v442 = vpop.permute.xlu0 %441
        %443 = vrot.lane.b32.xlu0 %v382, 112
        %v444 = vpop.permute.xlu0 %443
        %vm445 = vcmask 916480
        %v446 = vsel %vm445, %v440, %v442
        %v447 = vsel %vm445, %v442, %v444
        %v450 = vsel %vm416, %v446, 0.0
        %v451 = vsel %vm417, %v447, 0.0
        %452 = vrot.lane.b32.xlu0 %v379, 110
        %v453 = vpop.permute.xlu0 %452
        %454 = vrot.lane.b32.xlu0 %v369, 110
        %v455 = vpop.permute.xlu0 %454
        %456 = vrot.lane.b32.xlu0 %v382, 110
        %v457 = vpop.permute.xlu0 %456
        %vm458 = vcmask 900096
        %v459 = vsel %vm458, %v453, %v455
        %v460 = vsel %vm458, %v455, %v457
        %v463 = vsel %vm422, %v459, 0.0
        %v464 = vsel %vm423, %v460, 0.0
        %465 = vrot.lane.b32.xlu0 %v379, 96
        %v466 = vpop.permute.xlu0 %465
        %467 = vrot.lane.b32.xlu0 %v369, 96
        %v468 = vpop.permute.xlu0 %467
        %469 = vrot.lane.b32.xlu0 %v382, 96
        %v470 = vpop.permute.xlu0 %469
        %vm471 = vcmask 785408
        %v472 = vsel %vm471, %v466, %v468
        %v473 = vsel %vm471, %v468, %v470
        %v476 = vsel %vm416, %v472, 0.0
        %v477 = vsel %vm417, %v473, 0.0
        %478 = vrot.lane.b32.xlu0 %v379, 94
        %v479 = vpop.permute.xlu0 %478
        %480 = vrot.lane.b32.xlu0 %v369, 94
        %v481 = vpop.permute.xlu0 %480
        %482 = vrot.lane.b32.xlu0 %v382, 94
        %v483 = vpop.permute.xlu0 %482
        %vm484 = vcmask 769024
        %v485 = vsel %vm484, %v479, %v481
        %v486 = vsel %vm484, %v481, %v483
        %v489 = vsel %vm422, %v485, 0.0
        %v490 = vsel %vm423, %v486, 0.0
        %v491 = vrot.slane %v379, 5
        %v492 = vrot.slane %v369, 5
        %v493 = vrot.slane %v382, 5
        %494 = vrot.lane.b32.xlu0 %v491, 127
        %v495 = vpop.permute.xlu0 %494
        %496 = vrot.lane.b32.xlu0 %v492, 127
        %v497 = vpop.permute.xlu0 %496
        %498 = vrot.lane.b32.xlu0 %v493, 127
        %v499 = vpop.permute.xlu0 %498
        %vm500 = vcmask 1039360
        %v501 = vsel %vm500, %v495, %v497
        %v502 = vsel %vm500, %v497, %v499
        %v507 = vrot.slane %v437, 2
        %v508 = vrot.slane %v438, 2
        %v513 = vrot.slane %v450, 7
        %v514 = vrot.slane %v451, 7
        %v517 = vrot.slane %v379, 4
        %v518 = vrot.slane %v369, 4
        %v519 = vrot.slane %v382, 4
        %520 = vrot.lane.b32.xlu0 %v517, 111
        %v521 = vpop.permute.xlu0 %520
        %522 = vrot.lane.b32.xlu0 %v518, 111
        %v523 = vpop.permute.xlu0 %522
        %524 = vrot.lane.b32.xlu0 %v519, 111
        %v525 = vpop.permute.xlu0 %524
        %vm526 = vcmask 908288
        %v527 = vsel %vm526, %v521, %v523
        %v528 = vsel %vm526, %v523, %v525
        %v533 = vrot.slane %v463, 1
        %v534 = vrot.slane %v464, 1
        %v539 = vrot.slane %v476, 6
        %v540 = vrot.slane %v477, 6
        %v543 = vrot.slane %v379, 3
        %v544 = vrot.slane %v369, 3
        %v545 = vrot.slane %v382, 3
        %546 = vrot.lane.b32.xlu0 %v543, 95
        %v547 = vpop.permute.xlu0 %546
        %548 = vrot.lane.b32.xlu0 %v544, 95
        %v549 = vpop.permute.xlu0 %548
        %550 = vrot.lane.b32.xlu0 %v545, 95
        %v551 = vpop.permute.xlu0 %550
        %vm552 = vcmask 777216
        %v553 = vsel %vm552, %v547, %v549
        %v554 = vsel %vm552, %v549, %v551
        %vm557 = vcmask 1042432
        %v558 = vsel %vm557, %v418, %v501
        %v559 = vsel %vm557, %v419, %v502
        %vm560 = vcmask 1045504
        %v561 = vsel %vm560, %v558, %v507
        %v562 = vsel %vm560, %v559, %v508
        %vm563 = vcmask 1040384
        %v564 = vsel %vm563, %v507, %v513
        %v565 = vsel %vm563, %v508, %v514
        %vm566 = vcmask 1043456
        %v567 = vsel %vm566, %v564, %v527
        %v568 = vsel %vm566, %v565, %v528
        %vm569 = vcmask 1046528
        %v570 = vsel %vm569, %v567, %v533
        %v571 = vsel %vm569, %v568, %v534
        %vm572 = vcmask 1041408
        %v573 = vsel %vm572, %v533, %v539
        %v574 = vsel %vm572, %v534, %v540
        %vm575 = vcmask 1044480
        %v576 = vsel %vm575, %v573, %v553
        %v577 = vsel %vm575, %v574, %v554
        %v578 = vld [vmem:[%s3] sm:$0xff]
        %v579 = vld [vmem:[%s3 + $0x8] sm:$0xff]
        %v580 = vld [vmem:[%s3 + $0x10] sm:$0xff]
        %v581 = vld [vmem:[%s3 + $0x18] sm:$0xff]
        %v582 = vld [vmem:[%s3 + $0x20] sm:$0xff]
        %v583 = vld [vmem:[%s3 + $0x28] sm:$0xff]
        %vm584 = vcmask 220160
        %v586 = vsel %vm584, %v578, 0
        %v589 = vsel %vm584, %v579, 0
        %v592 = vsel %vm584, %v580, 0
        %v595 = vsel %vm584, %v581, 0
        %v598 = vsel %vm584, %v582, 0
        %v601 = vsel %vm584, %v583, 0
        %v604 = vsel %vm557, %v489, 0
        %v607 = vsel %vm557, %v490, 0
        %609 = vmatprep.subr.mxu0 0.0
        %610 = vmatpush1.msra.mxu0 0.0
        %611 = vmatprep.subr.mxu0 0.0
        %612 = vmatpush1.msra.mxu0 0.0
        %613 = vmatprep.subr.mxu0 0.0
        %614 = vmatpush1.msra.mxu0 0.0
        %615 = vmatprep.subr.mxu0 0.0
        %616 = vmatpush1.msra.mxu0 0.0
        %617 = vmatprep.subr.mxu0 0.0
        %618 = vmatpush1.msra.mxu0 0.0
        %619 = vmatprep.subr.mxu0 0.0
        %620 = vmatpush1.msra.mxu0 0.0
        %621 = vmatprep.subr.mxu0 0.0
        %622 = vmatpush1.msra.mxu0 0.0
        %623 = vmatprep.subr.mxu0 0.0
        %624 = vmatpush1.msra.mxu0 0.0
        %625 = vmatprep.subr.mxu0 0.0
        %626 = vmatpush1.msra.mxu0 0.0
        %627 = vmatprep.subr.mxu0 0.0
        %628 = vmatpush1.msra.mxu0 0.0
        %629 = vmatprep.subr.mxu0 0.0
        %630 = vmatpush1.msra.mxu0 0.0
        %631 = vmatprep.subr.mxu0 0.0
        %632 = vmatpush1.msra.mxu0 0.0
        %633 = vmatprep.subr.mxu0 %v607
        %634 = vmatpush1.msra.mxu0 %v604
        %635 = vmatprep.subr.mxu0 %v577
        %636 = vmatpush1.msra.mxu0 %v576
        %637 = vmatprep.subr.mxu0 %v571
        %638 = vmatpush1.msra.mxu0 %v570
        %639 = vmatprep.subr.mxu0 %v562
        %640 = vmatpush1.msra.mxu0 %v561
        %641 = vmatprep.subr.mxu0 0.0
        %642 = vmatpush2.msra.mxu0 0.0
        %643 = vmatprep.subr.mxu0 0.0
        %644 = vmatpush2.msra.mxu0 0.0
        %645 = vmatprep.subr.mxu0 0.0
        %646 = vmatpush2.msra.mxu0 0.0
        %647 = vmatprep.subr.mxu0 0.0
        %648 = vmatpush2.msra.mxu0 0.0
        %649 = vmatprep.subr.mxu0 0.0
        %650 = vmatpush2.msra.mxu0 0.0
        %651 = vmatprep.subr.mxu0 0.0
        %652 = vmatpush2.msra.mxu0 0.0
        %653 = vmatprep.subr.mxu0 0.0
        %654 = vmatpush2.msra.mxu0 0.0
        %655 = vmatprep.subr.mxu0 0.0
        %656 = vmatpush2.msra.mxu0 0.0
        %657 = vmatprep.subr.mxu0 0.0
        %658 = vmatpush2.msra.mxu0 0.0
        %659 = vmatprep.subr.mxu0 0.0
        %660 = vmatpush2.msra.mxu0 0.0
        %661 = vmatprep.subr.mxu0 0.0
        %662 = vmatpush2.msra.mxu0 0.0
        %663 = vmatprep.subr.mxu0 0.0
        %664 = vmatpush2.msra.mxu0 0.0
        %665 = vmatprep.subr.mxu0 0.0
        %666 = vmatpush2.msra.mxu0 0.0
        %667 = vmatprep.subr.mxu0 0.0
        %668 = vmatpush2.msra.mxu0 0.0
        %669 = vmatprep.subr.mxu0 0.0
        %670 = vmatpush2.msra.mxu0 0.0
        %671 = vmatprep.subr.mxu0 0.0
        %672 = vmatpush2.msra.mxu0 0.0
        %673 = vmatprep.mubr.f32.mxu0 0.0
        %674 = vmatmul.mubr.f32.gmra.mxu0 %v586
        %v675 = vpop.f32.mrf.mxu0
        %v676 = vadd.f32 0.0, %v675
        %v677 = vpop.f32.mrf.mxu0
        %v678 = vadd.f32 0.0, %v677
        %679 = vmatprep.mubr.f32.mxu0 0.0
        %680 = vmatmul.mubr.f32.gmra.mxu0 %v589
        %v681 = vpop.f32.mrf.mxu0
        %v682 = vadd.f32 0.0, %v681
        %v683 = vpop.f32.mrf.mxu0
        %v684 = vadd.f32 0.0, %v683
        %685 = vmatprep.mubr.f32.mxu0 0.0
        %686 = vmatmul.mubr.f32.gmra.mxu0 %v592
        %v687 = vpop.f32.mrf.mxu0
        %v688 = vadd.f32 0.0, %v687
        %v689 = vpop.f32.mrf.mxu0
        %v690 = vadd.f32 0.0, %v689
        %691 = vmatprep.mubr.f32.mxu0 0.0
        %692 = vmatmul.mubr.f32.gmra.mxu0 %v595
        %v693 = vpop.f32.mrf.mxu0
        %v694 = vadd.f32 0.0, %v693
        %v695 = vpop.f32.mrf.mxu0
        %v696 = vadd.f32 0.0, %v695
        %697 = vmatprep.mubr.f32.mxu0 0.0
        %698 = vmatmul.mubr.f32.gmra.mxu0 %v598
        %v699 = vpop.f32.mrf.mxu0
        %v700 = vadd.f32 0.0, %v699
        %v701 = vpop.f32.mrf.mxu0
        %v702 = vadd.f32 0.0, %v701
        %703 = vmatprep.mubr.f32.mxu0 0.0
        %704 = vmatmul.mubr.f32.gmra.mxu0 %v601
        %v705 = vpop.f32.mrf.mxu0
        %v706 = vadd.f32 0.0, %v705
        %v707 = vpop.f32.mrf.mxu0
        %v708 = vadd.f32 0.0, %v707
        %709 = vdwg.mxu0
        %710 = vst [vmem:[%s301] sm:$0xff] %v676
        %711 = vst [vmem:[%s301 + $0x8] sm:$0xff] %v678
        %712 = vst [vmem:[%s301 + $0x10] sm:$0xff] %v682
        %713 = vst [vmem:[%s301 + $0x18] sm:$0xff] %v684
        %714 = vst [vmem:[%s301 + $0x20] sm:$0xff] %v688
        %715 = vst [vmem:[%s301 + $0x28] sm:$0xff] %v690
        %716 = vst [vmem:[%s301 + $0x30] sm:$0xff] %v694
        %717 = vst [vmem:[%s301 + $0x38] sm:$0xff] %v696
        %718 = vst [vmem:[%s301 + $0x40] sm:$0xff] %v700
        %719 = vst [vmem:[%s301 + $0x48] sm:$0xff] %v702
        %720 = vst [vmem:[%s301 + $0x50] sm:$0xff] %v706
        %721 = vst [vmem:[%s301 + $0x58] sm:$0xff] %v708
        %s722 = sand.u32 %s161, 1
        %s723 = scalar_lea.sflag [#allocation3], %s722
        %s724 = sand.u32 %s161, 1
        %s725 = smul.addr %s724, 96
        %s726 = scalar_lea.vmem [#allocation2], %s725
        // Predicated region
        $region37: #{tpu_custom_call.1} parent=35 // pred_check
          %p727 = pneg %p171
        $region38: #{tpu_custom_call.1} parent=35 // pred_check_branch
          %729 = sbr.rel (%p727) target = $region40
        $region39: #{tpu_custom_call.1} parent=35 // pred_region
          %s730 = smul.u32 2, %s23
          %s732 = ssub.s32 1536, 1536
          %733 = vsyncadd %s723, %s732
          %s734 = smul.addr %s22, 12
          %s735 = sadd.s32 %s730, %s734
          %s736 = smul.addr %s735, 128
          %s737 = scalar_lea.hbm %s4, %s736
          %s738 = sshll.u32 %s726, 4
          %s739 = int_to_ptr.vmem [resolvable:$true] %s738
          %744 = dma.vmem_to_hbm [thread:$0]  %s739, 1536, %s737, %s723, 256, 256, 16
        $region40: #{tpu_custom_call.1} parent=35 // pred_fallthru
          _
      $region36: #{tpu_custom_call.1} parent=5 // pred_fallthru
        _
      %p745 = scmp.le.s32.totalorder 2, %s13
      // Predicated region
      $region41: #{tpu_custom_call.1} parent=5 // pred_check
        %p746 = pneg %p745
      $region42: #{tpu_custom_call.1} parent=5 // pred_check_branch
        %748 = sbr.rel (%p746) target = $region44
      $region43: #{tpu_custom_call.1} parent=5 // pred_region
        %s749 = ssub.s32 %s13, 2
        // Predicated region
        $region45: #{tpu_custom_call.1} parent=43 // pred_check
          %p750 = pneg %p177
        $region46: #{tpu_custom_call.1} parent=43 // pred_check_branch
          %752 = sbr.rel (%p750) target = $region48
        $region47: #{tpu_custom_call.1} parent=43 // pred_region
          %s753 = sand.u32 %s162, 1
          %s754 = scalar_lea.sflag [#allocation3], %s753
          %s755 = sand.u32 %s162, 1
          %s756 = smul.addr %s755, 96
          %s757 = scalar_lea.vmem [#allocation2], %s756
          %758 = dma.done %s754, 1536
        $region48: #{tpu_custom_call.1} parent=43 // pred_fallthru
          _
      $region44: #{tpu_custom_call.1} parent=5 // pred_fallthru
        _
    $region6: #{tpu_custom_call.1} parent=1 // loop_footer
      %s17 = sadd.s32 1, %s13
    $region7: #{tpu_custom_call.1} parent=1 // loop_footer_branch
      %12 = sbr.rel target = $region3
    $region8: #{tpu_custom_call.1} parent=1 // loop_exit
      _
    %759 = vsyncpa [#allocation3], 1
    %s760 = scalar_lea.sflag [#allocation3], 1
    %761 = vsyncpa %s760, 1

</llo_original>
